<compile_context>
chip_gen: v7x
topology: tpu7x:2x2x1
jax: 0.10.0
libtpu: 0.0.40
codegen_flags: <defaults>
</compile_context>

<pallas_src>
import math

import jax
import jax.numpy as jnp
from jax.experimental import pallas as pl
from jax.experimental.pallas import tpu as pltpu


# --------------------------------------------------------------------------
# Static pooling geometry (PyTorch MaxPool2d, floor mode)
# --------------------------------------------------------------------------
def _level_geometry(H, W, pool_size):
    """Static window bounds for one pyramid level."""
    h_wid = int(math.ceil(H / pool_size))
    w_wid = int(math.ceil(W / pool_size))
    h_pad = (h_wid * pool_size - H + 1) // 2
    w_pad = (w_wid * pool_size - W + 1) // 2

    out_h = (H + 2 * h_pad - h_wid) // h_wid + 1
    out_w = (W + 2 * w_pad - w_wid) // w_wid + 1

    # Clamp windows to the valid region. MaxPool2d pads with -inf, so as long
    # as every window keeps >=1 valid element the result is identical.
    h_bounds = []
    for oh in range(out_h):
        hs = max(oh * h_wid - h_pad, 0)
        he = min(oh * h_wid - h_pad + h_wid, H)
        assert he > hs, "SPP window collapsed to empty after clamping (H axis)"
        h_bounds.append((hs, he))
    w_bounds = []
    for ow in range(out_w):
        ws = max(ow * w_wid - w_pad, 0)
        we = min(ow * w_wid - w_pad + w_wid, W)
        assert we > ws, "SPP window collapsed to empty after clamping (W axis)"
        w_bounds.append((ws, we))

    return out_h, out_w, h_bounds, w_bounds


def _covers(coarse_bounds, fine_bounds):
    """True iff every coarse window is an exact union of consecutive fine windows."""
    for cs, ce in coarse_bounds:
        inner = [(s, e) for s, e in fine_bounds if s >= cs and e <= ce]
        if not inner or inner[0][0] != cs or inner[-1][1] != ce:
            return False
        for (_, e0), (s1, _) in zip(inner, inner[1:]):
            if e0 != s1:
                return False
        for s, e in fine_bounds:  # no fine window may straddle the coarse one
            if s < ce and e > cs and not (s >= cs and e <= ce):
                return False
    return True


# --------------------------------------------------------------------------
# Kernel
# --------------------------------------------------------------------------
def _make_spp_kernel(levels, offsets, pp_sizes):
    """Kernel computing every pyramid level for one (sample, channel-block).

    x_ref: (1, cb, H, W)        -- NCHW block, read straight from HBM
    o_ref: (1, cb, total_pp)    -- per-level segments at static lane offsets
    """
    base = max(range(len(levels)), key=lambda i: pp_sizes[i])  # finest level
    bh_bounds, bw_bounds = levels[base][2], levels[base][3]
    base_out_w = levels[base][1]
    derivable = [
        i != base
        and _covers(levels[i][2], bh_bounds)
        and _covers(levels[i][3], bw_bounds)
        for i in range(len(levels))
    ]

    def kernel(x_ref, o_ref):
        x = x_ref[0]  # (cb, H, W): H on sublanes, W on lanes

        def level_cols_from_x(h_bounds, w_bounds):
            cols = []
            for hs, he in h_bounds:
                # One sublane-window reduce shared by the whole row of windows.
                # (XLU work, but the kernel is DMA-bound so this is hidden.)
                row = jnp.max(x[:, hs:he, :], axis=1)          # (cb, W)
                for ws, we in w_bounds:
                    cols.append(jnp.max(row[:, ws:we], axis=1, keepdims=True))
            return cols                                         # list of (cb, 1)

        def store_level(i, cols):
            off, pp = offsets[i], pp_sizes[i]
            lvl = cols[0] if len(cols) == 1 else jnp.concatenate(cols, axis=1)
            o_ref[0, :, off:off + pp] = lvl                     # per-level store

        # Finest level: the only full pass over x.
        base_cols = level_cols_from_x(bh_bounds, bw_bounds)
        store_level(base, base_cols)

        for i, (out_h, out_w, h_bounds, w_bounds) in enumerate(levels):
            if i == base:
                continue
            if derivable[i]:
                # Hierarchical max over the finest level's window maxima
                # (pure elementwise VPU work, no extra reads of x).
                cols = []
                for hs, he in h_bounds:
                    h_idx = [k for k, (s, e) in enumerate(bh_bounds)
                             if s >= hs and e <= he]
                    for ws, we in w_bounds:
                        w_idx = [k for k, (s, e) in enumerate(bw_bounds)
                                 if s >= ws and e <= we]
                        acc = None
                        for hi in h_idx:
                            for wi in w_idx:
                                v = base_cols[hi * base_out_w + wi]
                                acc = v if acc is None else jnp.maximum(acc, v)
                        cols.append(acc)
            else:
                cols = level_cols_from_x(h_bounds, w_bounds)
            store_level(i, cols)

    return kernel


# --------------------------------------------------------------------------
# Tiling / VMEM budgeting (generation aware)
# --------------------------------------------------------------------------
def _vmem_budget():
    """Return (vmem_limit_cap_bytes, per-input-block budget bytes)."""
    phys = 128 * 1024 * 1024
    try:
        info = pltpu.get_tpu_info()
        phys = int(getattr(info, "vmem_capacity_bytes", phys)) or phys
    except Exception:
        pass
    if phys <= 64 * 1024 * 1024:                    # v7x-class: 64 MiB per TC
        return 48 * 1024 * 1024, 18 * 1024 * 1024
    return 64 * 1024 * 1024, 24 * 1024 * 1024       # v5e / v6e: 128 MiB


def _pick_channel_block(N, C, H, W, itemsize, budget_bytes, min_steps=4):
    """Largest channel block (divisor of C, multiple of 8 or == C) whose input
    block fits the (double-buffer-aware) budget; prefer enough grid steps for
    DMA/compute overlap and both v7x TensorCores, without shrinking blocks
    below ~1 MiB just to add steps."""
    plane = H * W * itemsize
    valid = [d for d in range(1, C + 1) if C % d == 0 and (d % 8 == 0 or d == C)]
    fitting = [d for d in valid if d * plane <= budget_bytes]
    if not fitting:
        # Degenerate: even the smallest legal block exceeds the budget; caller
        # raises vmem_limit to match.
        # TODO(synk): split H across the grid as well for very large H*W*C.
        return valid[0]

    def steps(d):
        return N * (C // d)

    for target, floor in ((min_steps, 1 << 20), (2, 256 << 10)):
        cands = [d for d in fitting if steps(d) >= target and d * plane >= floor]
        if cands:
            return max(cands)
    return max(fitting)


# --------------------------------------------------------------------------
# Public entry point
# --------------------------------------------------------------------------
def spatial_pyramid_pool(x, out_pool_size):
    """Equivalent of Spatial_Pyramid_Pool.forward (nn.MaxPool2d pooling)."""
    N, C, H, W = x.shape

    levels = [_level_geometry(H, W, p) for p in out_pool_size]
    pp_sizes = [oh * ow for oh, ow, _, _ in levels]
    offsets = [0]
    for pp in pp_sizes[:-1]:
        offsets.append(offsets[-1] + pp)
    total_pp = sum(pp_sizes)

    itemsize = jnp.dtype(x.dtype).itemsize
    vmem_cap, block_budget = _vmem_budget()
    cb = _pick_channel_block(N, C, H, W, itemsize, block_budget)

    in_block = cb * H * W * itemsize
    out_block = cb * total_pp * itemsize
    needed = 2 * (in_block + out_block) + (4 << 20)   # x2 double buffering + headroom
    vmem_limit = min(max(needed, 32 << 20), vmem_cap)
    vmem_limit = max(vmem_limit, needed)              # degenerate fallback only

    pooled = pl.pallas_call(
        _make_spp_kernel(levels, offsets, pp_sizes),
        out_shape=jax.ShapeDtypeStruct((N, C, total_pp), x.dtype),
        grid=(N, C // cb),
        in_specs=[pl.BlockSpec((1, cb, H, W), lambda n, c: (n, c, 0, 0))],
        out_specs=pl.BlockSpec((1, cb, total_pp), lambda n, c: (n, c, 0)),
        compiler_params=pltpu.CompilerParams(
            dimension_semantics=("parallel", "parallel"),
            vmem_limit_bytes=int(vmem_limit),
        ),
        cost_estimate=pl.CostEstimate(
            flops=len(levels) * N * C * H * W,
            transcendentals=0,
            bytes_accessed=N * C * (H * W + total_pp) * itemsize,
        ),
    )(x)                                               # (N, C, total_pp)

    # PyTorch ordering: per level, .view(N, -1) of (N, C, oh, ow) is
    # channel-major then window -- exactly a contiguous reshape of the
    # (N, C, pp) level segment. Output is tiny, so this is negligible.
    pieces = []
    for pp, off in zip(pp_sizes, offsets):
        pieces.append(pooled[:, :, off:off + pp].reshape(N, C * pp))
    return jnp.concatenate(pieces, axis=1)


# --------------------------------------------------------------------------
# Pure-JAX reference (no Pallas) for validation
# --------------------------------------------------------------------------
def _spp_reference(x, out_pool_size):
    N, C, H, W = x.shape
    pieces = []
    for p in out_pool_size:
        _, _, h_bounds, w_bounds = _level_geometry(H, W, p)
        wins = []
        for hs, he in h_bounds:
            for ws, we in w_bounds:
                wins.append(jnp.max(x[:, :, hs:he, ws:we], axis=(2, 3)))  # (N, C)
        lvl = jnp.stack(wins, axis=-1)                  # (N, C, out_h*out_w)
        pieces.append(lvl.reshape(N, -1))
    return jnp.concatenate(pieces, axis=1)


if __name__ == "__main__":
    key = jax.random.PRNGKey(0)
    N, C, H, W = 2, 4, 16, 16
    x = jax.random.normal(key, (N, C, H, W), dtype=jnp.float32)

    out_pool_size = [4, 2, 1]
    spp = jax.block_until_ready(spatial_pyramid_pool(x, out_pool_size))

    expected_features = C * sum(p * p for p in out_pool_size)
    assert spp.shape == (N, expected_features), spp.shape
    assert spp.dtype == x.dtype

    ref = _spp_reference(x, out_pool_size)
    assert jnp.allclose(spp, ref), "Pallas SPP does not match pure-JAX reference"

    print("KERNEL_OK")
</pallas_src>

<mosaic_0001>
module attributes {stable_mosaic.version = 11 : i64} {
  func.func @kernel(%arg0: i32, %arg1: i32, %arg2: memref<1x4x16x16xf32, #tpu.memory_space<vmem>>, %arg3: memref<1x4x21xf32, #tpu.memory_space<vmem>>) attributes {dimension_semantics = [#tpu.dimension_semantics<parallel>, #tpu.dimension_semantics<parallel>], iteration_bounds = array<i64: 2, 1>, scalar_prefetch = 0 : i64, scratch_operands = 0 : i64, tpu.core_type = #tpu.core_type<tc>, window_params = [{transform_indices = @transform_0, window_bounds = array<i64: 1, 4, 16, 16>}, {transform_indices = @transform_1, window_bounds = array<i64: 1, 4, 21>}]} {
    %c0 = arith.constant 0 : index
    %c0_0 = arith.constant 0 : index
    %c0_1 = arith.constant 0 : index
    %c0_2 = arith.constant 0 : index
    %0 = vector.load %arg2[%c0, %c0_0, %c0_1, %c0_2] : memref<1x4x16x16xf32, #tpu.memory_space<vmem>>, vector<1x4x16x16xf32>
    %1 = vector.shape_cast %0 : vector<1x4x16x16xf32> to vector<4x16x16xf32>
    %2 = vector.extract_strided_slice %1 {offsets = [0, 0, 0], sizes = [4, 4, 16], strides = [1, 1, 1]} : vector<4x16x16xf32> to vector<4x4x16xf32>
    %cst = arith.constant dense<0xFF800000> : vector<4x16xf32>
    %3 = vector.multi_reduction <maximumf>, %2, %cst [1] : vector<4x4x16xf32> to vector<4x16xf32>
    %4 = vector.extract_strided_slice %3 {offsets = [0, 0], sizes = [4, 4], strides = [1, 1]} : vector<4x16xf32> to vector<4x4xf32>
    %cst_3 = arith.constant dense<0xFF800000> : vector<4xf32>
    %5 = vector.multi_reduction <maximumf>, %4, %cst_3 [1] : vector<4x4xf32> to vector<4xf32>
    %6 = vector.shape_cast %5 : vector<4xf32> to vector<4x1xf32>
    %7 = vector.extract_strided_slice %3 {offsets = [0, 4], sizes = [4, 4], strides = [1, 1]} : vector<4x16xf32> to vector<4x4xf32>
    %cst_4 = arith.constant dense<0xFF800000> : vector<4xf32>
    %8 = vector.multi_reduction <maximumf>, %7, %cst_4 [1] : vector<4x4xf32> to vector<4xf32>
    %9 = vector.shape_cast %8 : vector<4xf32> to vector<4x1xf32>
    %10 = vector.extract_strided_slice %3 {offsets = [0, 8], sizes = [4, 4], strides = [1, 1]} : vector<4x16xf32> to vector<4x4xf32>
    %cst_5 = arith.constant dense<0xFF800000> : vector<4xf32>
    %11 = vector.multi_reduction <maximumf>, %10, %cst_5 [1] : vector<4x4xf32> to vector<4xf32>
    %12 = vector.shape_cast %11 : vector<4xf32> to vector<4x1xf32>
    %13 = vector.extract_strided_slice %3 {offsets = [0, 12], sizes = [4, 4], strides = [1, 1]} : vector<4x16xf32> to vector<4x4xf32>
    %cst_6 = arith.constant dense<0xFF800000> : vector<4xf32>
    %14 = vector.multi_reduction <maximumf>, %13, %cst_6 [1] : vector<4x4xf32> to vector<4xf32>
    %15 = vector.shape_cast %14 : vector<4xf32> to vector<4x1xf32>
    %16 = vector.extract_strided_slice %1 {offsets = [0, 4, 0], sizes = [4, 4, 16], strides = [1, 1, 1]} : vector<4x16x16xf32> to vector<4x4x16xf32>
    %cst_7 = arith.constant dense<0xFF800000> : vector<4x16xf32>
    %17 = vector.multi_reduction <maximumf>, %16, %cst_7 [1] : vector<4x4x16xf32> to vector<4x16xf32>
    %18 = vector.extract_strided_slice %17 {offsets = [0, 0], sizes = [4, 4], strides = [1, 1]} : vector<4x16xf32> to vector<4x4xf32>
    %cst_8 = arith.constant dense<0xFF800000> : vector<4xf32>
    %19 = vector.multi_reduction <maximumf>, %18, %cst_8 [1] : vector<4x4xf32> to vector<4xf32>
    %20 = vector.shape_cast %19 : vector<4xf32> to vector<4x1xf32>
    %21 = vector.extract_strided_slice %17 {offsets = [0, 4], sizes = [4, 4], strides = [1, 1]} : vector<4x16xf32> to vector<4x4xf32>
    %cst_9 = arith.constant dense<0xFF800000> : vector<4xf32>
    %22 = vector.multi_reduction <maximumf>, %21, %cst_9 [1] : vector<4x4xf32> to vector<4xf32>
    %23 = vector.shape_cast %22 : vector<4xf32> to vector<4x1xf32>
    %24 = vector.extract_strided_slice %17 {offsets = [0, 8], sizes = [4, 4], strides = [1, 1]} : vector<4x16xf32> to vector<4x4xf32>
    %cst_10 = arith.constant dense<0xFF800000> : vector<4xf32>
    %25 = vector.multi_reduction <maximumf>, %24, %cst_10 [1] : vector<4x4xf32> to vector<4xf32>
    %26 = vector.shape_cast %25 : vector<4xf32> to vector<4x1xf32>
    %27 = vector.extract_strided_slice %17 {offsets = [0, 12], sizes = [4, 4], strides = [1, 1]} : vector<4x16xf32> to vector<4x4xf32>
    %cst_11 = arith.constant dense<0xFF800000> : vector<4xf32>
    %28 = vector.multi_reduction <maximumf>, %27, %cst_11 [1] : vector<4x4xf32> to vector<4xf32>
    %29 = vector.shape_cast %28 : vector<4xf32> to vector<4x1xf32>
    %30 = vector.extract_strided_slice %1 {offsets = [0, 8, 0], sizes = [4, 4, 16], strides = [1, 1, 1]} : vector<4x16x16xf32> to vector<4x4x16xf32>
    %cst_12 = arith.constant dense<0xFF800000> : vector<4x16xf32>
    %31 = vector.multi_reduction <maximumf>, %30, %cst_12 [1] : vector<4x4x16xf32> to vector<4x16xf32>
    %32 = vector.extract_strided_slice %31 {offsets = [0, 0], sizes = [4, 4], strides = [1, 1]} : vector<4x16xf32> to vector<4x4xf32>
    %cst_13 = arith.constant dense<0xFF800000> : vector<4xf32>
    %33 = vector.multi_reduction <maximumf>, %32, %cst_13 [1] : vector<4x4xf32> to vector<4xf32>
    %34 = vector.shape_cast %33 : vector<4xf32> to vector<4x1xf32>
    %35 = vector.extract_strided_slice %31 {offsets = [0, 4], sizes = [4, 4], strides = [1, 1]} : vector<4x16xf32> to vector<4x4xf32>
    %cst_14 = arith.constant dense<0xFF800000> : vector<4xf32>
    %36 = vector.multi_reduction <maximumf>, %35, %cst_14 [1] : vector<4x4xf32> to vector<4xf32>
    %37 = vector.shape_cast %36 : vector<4xf32> to vector<4x1xf32>
    %38 = vector.extract_strided_slice %31 {offsets = [0, 8], sizes = [4, 4], strides = [1, 1]} : vector<4x16xf32> to vector<4x4xf32>
    %cst_15 = arith.constant dense<0xFF800000> : vector<4xf32>
    %39 = vector.multi_reduction <maximumf>, %38, %cst_15 [1] : vector<4x4xf32> to vector<4xf32>
    %40 = vector.shape_cast %39 : vector<4xf32> to vector<4x1xf32>
    %41 = vector.extract_strided_slice %31 {offsets = [0, 12], sizes = [4, 4], strides = [1, 1]} : vector<4x16xf32> to vector<4x4xf32>
    %cst_16 = arith.constant dense<0xFF800000> : vector<4xf32>
    %42 = vector.multi_reduction <maximumf>, %41, %cst_16 [1] : vector<4x4xf32> to vector<4xf32>
    %43 = vector.shape_cast %42 : vector<4xf32> to vector<4x1xf32>
    %44 = vector.extract_strided_slice %1 {offsets = [0, 12, 0], sizes = [4, 4, 16], strides = [1, 1, 1]} : vector<4x16x16xf32> to vector<4x4x16xf32>
    %cst_17 = arith.constant dense<0xFF800000> : vector<4x16xf32>
    %45 = vector.multi_reduction <maximumf>, %44, %cst_17 [1] : vector<4x4x16xf32> to vector<4x16xf32>
    %46 = vector.extract_strided_slice %45 {offsets = [0, 0], sizes = [4, 4], strides = [1, 1]} : vector<4x16xf32> to vector<4x4xf32>
    %cst_18 = arith.constant dense<0xFF800000> : vector<4xf32>
    %47 = vector.multi_reduction <maximumf>, %46, %cst_18 [1] : vector<4x4xf32> to vector<4xf32>
    %48 = vector.shape_cast %47 : vector<4xf32> to vector<4x1xf32>
    %49 = vector.extract_strided_slice %45 {offsets = [0, 4], sizes = [4, 4], strides = [1, 1]} : vector<4x16xf32> to vector<4x4xf32>
    %cst_19 = arith.constant dense<0xFF800000> : vector<4xf32>
    %50 = vector.multi_reduction <maximumf>, %49, %cst_19 [1] : vector<4x4xf32> to vector<4xf32>
    %51 = vector.shape_cast %50 : vector<4xf32> to vector<4x1xf32>
    %52 = vector.extract_strided_slice %45 {offsets = [0, 8], sizes = [4, 4], strides = [1, 1]} : vector<4x16xf32> to vector<4x4xf32>
    %cst_20 = arith.constant dense<0xFF800000> : vector<4xf32>
    %53 = vector.multi_reduction <maximumf>, %52, %cst_20 [1] : vector<4x4xf32> to vector<4xf32>
    %54 = vector.shape_cast %53 : vector<4xf32> to vector<4x1xf32>
    %55 = vector.extract_strided_slice %45 {offsets = [0, 12], sizes = [4, 4], strides = [1, 1]} : vector<4x16xf32> to vector<4x4xf32>
    %cst_21 = arith.constant dense<0xFF800000> : vector<4xf32>
    %56 = vector.multi_reduction <maximumf>, %55, %cst_21 [1] : vector<4x4xf32> to vector<4xf32>
    %57 = vector.shape_cast %56 : vector<4xf32> to vector<4x1xf32>
    %58 = tpu.concatenate %6, %9, %12, %15, %20, %23, %26, %29, %34, %37, %40, %43, %48, %51, %54, %57 in 1 : vector<4x1xf32>, vector<4x1xf32>, vector<4x1xf32>, vector<4x1xf32>, vector<4x1xf32>, vector<4x1xf32>, vector<4x1xf32>, vector<4x1xf32>, vector<4x1xf32>, vector<4x1xf32>, vector<4x1xf32>, vector<4x1xf32>, vector<4x1xf32>, vector<4x1xf32>, vector<4x1xf32>, vector<4x1xf32> -> vector<4x16xf32>
    %c0_22 = arith.constant 0 : index
    %c0_23 = arith.constant 0 : index
    %c0_24 = arith.constant 0 : index
    %59 = vector.load %arg3[%c0_22, %c0_23, %c0_24] : memref<1x4x21xf32, #tpu.memory_space<vmem>>, vector<1x4x16xf32>
    %60 = vector.shape_cast %59 : vector<1x4x16xf32> to vector<4x16xf32>
    %61 = vector.shape_cast %58 : vector<4x16xf32> to vector<1x4x16xf32>
    tpu.vector_store %arg3[%c0_22, %c0_23, %c0_24], %61 {strides = array<i32>} : memref<1x4x21xf32, #tpu.memory_space<vmem>>, vector<1x4x16xf32>,
    %62 = arith.maximumf %6, %9 : vector<4x1xf32>
    %63 = arith.maximumf %62, %20 : vector<4x1xf32>
    %64 = arith.maximumf %63, %23 : vector<4x1xf32>
    %65 = arith.maximumf %12, %15 : vector<4x1xf32>
    %66 = arith.maximumf %65, %26 : vector<4x1xf32>
    %67 = arith.maximumf %66, %29 : vector<4x1xf32>
    %68 = arith.maximumf %34, %37 : vector<4x1xf32>
    %69 = arith.maximumf %68, %48 : vector<4x1xf32>
    %70 = arith.maximumf %69, %51 : vector<4x1xf32>
    %71 = arith.maximumf %40, %43 : vector<4x1xf32>
    %72 = arith.maximumf %71, %54 : vector<4x1xf32>
    %73 = arith.maximumf %72, %57 : vector<4x1xf32>
    %74 = tpu.concatenate %64, %67, %70, %73 in 1 : vector<4x1xf32>, vector<4x1xf32>, vector<4x1xf32>, vector<4x1xf32> -> vector<4x4xf32>
    %c0_25 = arith.constant 0 : index
    %c0_26 = arith.constant 0 : index
    %c16 = arith.constant 16 : index
    %75 = vector.load %arg3[%c0_25, %c0_26, %c16] : memref<1x4x21xf32, #tpu.memory_space<vmem>>, vector<1x4x4xf32>
    %76 = vector.shape_cast %75 : vector<1x4x4xf32> to vector<4x4xf32>
    %77 = vector.shape_cast %74 : vector<4x4xf32> to vector<1x4x4xf32>
    tpu.vector_store %arg3[%c0_25, %c0_26, %c16], %77 {strides = array<i32>} : memref<1x4x21xf32, #tpu.memory_space<vmem>>, vector<1x4x4xf32>,
    %78 = arith.maximumf %6, %9 : vector<4x1xf32>
    %79 = arith.maximumf %78, %12 : vector<4x1xf32>
    %80 = arith.maximumf %79, %15 : vector<4x1xf32>
    %81 = arith.maximumf %80, %20 : vector<4x1xf32>
    %82 = arith.maximumf %81, %23 : vector<4x1xf32>
    %83 = arith.maximumf %82, %26 : vector<4x1xf32>
    %84 = arith.maximumf %83, %29 : vector<4x1xf32>
    %85 = arith.maximumf %84, %34 : vector<4x1xf32>
    %86 = arith.maximumf %85, %37 : vector<4x1xf32>
    %87 = arith.maximumf %86, %40 : vector<4x1xf32>
    %88 = arith.maximumf %87, %43 : vector<4x1xf32>
    %89 = arith.maximumf %88, %48 : vector<4x1xf32>
    %90 = arith.maximumf %89, %51 : vector<4x1xf32>
    %91 = arith.maximumf %90, %54 : vector<4x1xf32>
    %92 = arith.maximumf %91, %57 : vector<4x1xf32>
    %c0_27 = arith.constant 0 : index
    %c0_28 = arith.constant 0 : index
    %c20 = arith.constant 20 : index
    %93 = vector.load %arg3[%c0_27, %c0_28, %c20] : memref<1x4x21xf32, #tpu.memory_space<vmem>>, vector<1x4x1xf32>
    %94 = vector.shape_cast %93 : vector<1x4x1xf32> to vector<4x1xf32>
    %95 = vector.shape_cast %92 : vector<4x1xf32> to vector<1x4x1xf32>
    tpu.vector_store %arg3[%c0_27, %c0_28, %c20], %95 {strides = array<i32>} : memref<1x4x21xf32, #tpu.memory_space<vmem>>, vector<1x4x1xf32>,
    return
  }
  func.func @transform_0(%arg0: i32, %arg1: i32) -> (i32, i32, i32, i32) {
    %c0_i32 = arith.constant 0 : i32
    %c0_i32_0 = arith.constant 0 : i32
    %c0_i32_1 = arith.constant 0 : i32
    return %arg0, %arg1, %c0_i32, %c0_i32_0 : i32, i32, i32, i32
  }
  func.func @transform_1(%arg0: i32, %arg1: i32) -> (i32, i32, i32) {
    %c0_i32 = arith.constant 0 : i32
    %c0_i32_0 = arith.constant 0 : i32
    return %arg0, %arg1, %c0_i32 : i32, i32, i32
  }
}

</mosaic_0001>

<llo_original>
// kernel: tpu_custom_call.1
$region0: #{tpu_custom_call.1}
  #allocation0 [shape = 'u32[]', space=smem, size = 0x4, offset = 0x4, fixed_abs, tag = 'smem constant byte address 0x4 - core index']
  #allocation1 [shape = 'u32[144,128]{1,0:T(1,128)}', space=vmem, size = 0x12000, scoped, tag = 'internal scratch']
  %s0 = inlined_call_operand.hbm [shape: f32[2,4,16,16], index: 0, kind: input, shape index: {}]
  %s1 = inlined_call_operand.hbm [shape: f32[2,4,21], index: 1, kind: output, shape index: {}]
  %s2 = sld [smem:[#allocation0]]
  $region41: #{tpu_custom_call.1} parent=0
    _
  %s4 = ssub.s32 1, %s2
  %s5 = scalar_select 0, %s4, %s2
  $region1: #{tpu_custom_call.1} parent=0
    #allocation2 [shape = 'u8[65536]{0}', space=vmem, size = 0x10000, scoped, tag = 'input window, operand 0']
    #allocation3 [shape = 's32[2]{0}', space=sflag, size = 0x8, scoped, tag = 'scoped memory for tpu_custom_call.1']
    #allocation4 [shape = 's32[2]{0}', space=sflag, size = 0x8, scoped, tag = 'scoped memory for tpu_custom_call.1']
    #allocation5 [shape = 'u8[4096]{0}', space=vmem, size = 0x1000, scoped, tag = 'output window, operand 0']
    %6 = vsyncpa [#allocation3], 0
    %s7 = scalar_lea.sflag [#allocation3], 1
    %8 = vsyncpa %s7, 0
    %9 = vsyncpa [#allocation4], 0
    %s10 = scalar_lea.sflag [#allocation4], 1
    %11 = vsyncpa %s10, 0
    loop: start=0, step=1, limit=4
    $region2: #{tpu_custom_call.1} parent=1 // loop_pre_header
      _
    $region3: #{tpu_custom_call.1} parent=1 // loop_header
      %s13 = sphi 0, %s17
      %p14 = scmp.ge.s32.totalorder %s13, 4
      %s20 = sphi 0, %s32
      %s21 = sphi 0, %s28
      %s22 = sphi 0, %s20
      %s23 = sphi 0, %s21
      %s24 = sphi 0, %s22
      %s25 = sphi 0, %s23
      %s37 = sphi 0, %s39
      %s40 = sphi 0, %s37
      %s41 = sphi 0, %s40
      %s57 = sphi 0, %s41
      %s65 = sphi 0, %s67
      %s68 = sphi 0, %s65
      %s69 = sphi 0, %s68
      %s85 = sphi 0, %s69
    $region4: #{tpu_custom_call.1} parent=1 // loop_header_branch
      %16 = sbr.rel (%p14) target = $region8
    $region5: #{tpu_custom_call.1} parent=1 // loop_body
      %s18 = ssub.s32 %s13, 1
      %s19 = ssub.s32 %s13, 2
      %s26 = sadd.s32 1, %s21
      %p27 = scmp.ge.s32.totalorder %s26, 1
      %s28 = scalar_select %p27, 0, %s26
      %s29 = sadd.s32 1, %s20
      %s30 = scalar_select %p27, %s29, %s20
      %p31 = scmp.ge.s32.totalorder %s30, 2
      %s32 = scalar_select %p31, 0, %s30
      %s33 = ssub.s32 %s20, %s32
      %s34 = ssub.s32 %s21, %s28
      %s35 = sor.u32 %s33, %s34
      %p36 = scmp.eq.s32.totalorder %s35, 0
      %s38 = sadd.s32 %s37, 1
      %s39 = scalar_select %p36, %s37, %s38
      %p42 = pneg %p36
      %p43 = scmp.eq.s32.totalorder %s13, 1
      %p44 = por %p42, %p43
      %p45 = scmp.ne.s32.totalorder %s37, %s40
      %p46 = scmp.eq.s32.totalorder %s13, 0
      %p47 = por %p45, %p46
      %p48 = scmp.ne.s32.totalorder %s37, %s40
      %p49 = scmp.eq.s32.totalorder %s18, 1
      %p50 = por %p48, %p49
      %p51 = scmp.ne.s32.totalorder %s40, %s41
      %p52 = scmp.eq.s32.totalorder %s18, 0
      %p53 = por %p51, %p52
      %p54 = scmp.ne.s32.totalorder %s40, %s41
      %p55 = scmp.eq.s32.totalorder %s19, 1
      %p56 = por %p54, %p55
      %p58 = scmp.ne.s32.totalorder %s41, %s57
      %p59 = scmp.eq.s32.totalorder %s19, 0
      %p60 = por %p58, %p59
      %s61 = ssub.s32 %s20, %s32
      %s62 = ssub.s32 %s21, %s28
      %s63 = sor.u32 %s61, %s62
      %p64 = scmp.eq.s32.totalorder %s63, 0
      %s66 = sadd.s32 %s65, 1
      %s67 = scalar_select %p64, %s65, %s66
      %p70 = pneg %p64
      %p71 = scmp.eq.s32.totalorder %s13, 1
      %p72 = por %p70, %p71
      %p73 = scmp.ne.s32.totalorder %s65, %s68
      %p74 = scmp.eq.s32.totalorder %s13, 0
      %p75 = por %p73, %p74
      %p76 = scmp.ne.s32.totalorder %s65, %s68
      %p77 = scmp.eq.s32.totalorder %s18, 1
      %p78 = por %p76, %p77
      %p79 = scmp.ne.s32.totalorder %s68, %s69
      %p80 = scmp.eq.s32.totalorder %s18, 0
      %p81 = por %p79, %p80
      %p82 = scmp.ne.s32.totalorder %s68, %s69
      %p83 = scmp.eq.s32.totalorder %s19, 1
      %p84 = por %p82, %p83
      %p86 = scmp.ne.s32.totalorder %s69, %s85
      %p87 = scmp.eq.s32.totalorder %s19, 0
      %p88 = por %p86, %p87
      %p89 = scmp.le.s32.totalorder 1, %s13
      %p90 = scmp.lt.s32.totalorder %s13, 3
      %p91 = pnand %p89, %p90
      %p92 = pneg %p91
      // Predicated region
      $region9: #{tpu_custom_call.1} parent=5 // pred_check
        _
      $region10: #{tpu_custom_call.1} parent=5 // pred_check_branch
        %94 = sbr.rel (%p91) target = $region12
      $region11: #{tpu_custom_call.1} parent=5 // pred_region
        %s95 = ssub.s32 %s13, 1
      $region12: #{tpu_custom_call.1} parent=5 // pred_fallthru
        _
      %p96 = scmp.lt.s32.totalorder %s13, 2
      // Predicated region
      $region13: #{tpu_custom_call.1} parent=5 // pred_check
        %p97 = pneg %p96
      $region14: #{tpu_custom_call.1} parent=5 // pred_check_branch
        %99 = sbr.rel (%p97) target = $region16
      $region15: #{tpu_custom_call.1} parent=5 // pred_region
        // Predicated region
        $region17: #{tpu_custom_call.1} parent=15 // pred_check
          %p100 = pneg %p47
        $region18: #{tpu_custom_call.1} parent=15 // pred_check_branch
          %102 = sbr.rel (%p100) target = $region20
        $region19: #{tpu_custom_call.1} parent=15 // pred_region
          %s103 = sand.u32 %s37, 1
          %s104 = scalar_lea.sflag [#allocation3], %s103
          %s105 = sand.u32 %s37, 1
          %s106 = smul.addr %s105, 64
          %s107 = scalar_lea.vmem [#allocation2], %s106
          %s108 = smul.u32 4, %s21
          %s110 = ssub.s32 1024, 1024
          %111 = vsyncadd %s104, %s110
          %s112 = smul.addr %s108, 2
          %s113 = smul.addr %s20, 8
          %s114 = sadd.s32 %s112, %s113
          %s115 = smul.addr %s114, 128
          %s116 = scalar_lea.hbm %s0, %s115
          %s117 = sshll.u32 %s107, 4
          %s118 = int_to_ptr.vmem [resolvable:$true] %s117
          %123 = dma.hbm_to_vmem [thread:$0]  %s116, 1024, %s118, %s104, 128, 128, 8
        $region20: #{tpu_custom_call.1} parent=15 // pred_fallthru
          _
      $region16: #{tpu_custom_call.1} parent=5 // pred_fallthru
        _
      %p124 = scmp.le.s32.totalorder 1, %s13
      %p125 = scmp.lt.s32.totalorder %s13, 3
      %p126 = pnand %p124, %p125
      %p127 = pneg %p126
      // Predicated region
      $region21: #{tpu_custom_call.1} parent=5 // pred_check
        _
      $region22: #{tpu_custom_call.1} parent=5 // pred_check_branch
        %129 = sbr.rel (%p126) target = $region24
      $region23: #{tpu_custom_call.1} parent=5 // pred_region
        %s130 = ssub.s32 %s13, 1
        %s131 = sand.u32 %s40, 1
        %s132 = scalar_lea.sflag [#allocation3], %s131
        %s133 = sand.u32 %s40, 1
        %s134 = smul.addr %s133, 64
        %s135 = scalar_lea.vmem [#allocation2], %s134
        // Predicated region
        $region25: #{tpu_custom_call.1} parent=23 // pred_check
          %p136 = pneg %p53
        $region26: #{tpu_custom_call.1} parent=23 // pred_check_branch
          %138 = sbr.rel (%p136) target = $region28
        $region27: #{tpu_custom_call.1} parent=23 // pred_region
          %139 = dma.done %s132, 1024
        $region28: #{tpu_custom_call.1} parent=23 // pred_fallthru
          _
        %s140 = sand.u32 %s40, 1
        %s141 = scalar_lea.sflag [#allocation3], %s140
        %s142 = sand.u32 %s40, 1
        %s143 = smul.addr %s142, 64
        %s144 = scalar_lea.vmem [#allocation2], %s143
        %p145 = pneg %p53
        %p146 = pneg %p50
        %p147 = pneg %p81
        %p148 = pneg %p78
        %s149 = sand.u32 %s68, 1
        %s150 = scalar_lea.sflag [#allocation4], %s149
        %s151 = sand.u32 %s68, 1
        %s152 = smul.addr %s151, 4
        %s153 = scalar_lea.vmem [#allocation5], %s152
        %s154 = smul.u32 4, %s23
        %v155 = vld [vmem:[%s135] sm:$0xff]
        %v156 = vld [vmem:[%s135 + $0x8] sm:$0xff]
        %v157 = vld [vmem:[%s135 + $0x10] sm:$0xff]
        %v158 = vld [vmem:[%s135 + $0x18] sm:$0xff]
        %v159 = vld [vmem:[%s135 + $0x20] sm:$0xff]
        %v160 = vld [vmem:[%s135 + $0x28] sm:$0xff]
        %v161 = vld [vmem:[%s135 + $0x30] sm:$0xff]
        %v162 = vld [vmem:[%s135 + $0x38] sm:$0xff]
        %vm163 = vcmask 125952
        %v164 = vsel %vm163, %v155, -inf
        %v165 = vrot.slane %v164, 4
        %v166 = vmax.f32 %v164, %v165
        %v167 = vrot.slane %v166, 2
        %v168 = vmax.f32 %v166, %v167
        %v169 = vrot.slane %v168, 1
        %v170 = vmax.f32 %v168, %v169
        %v171 = vsel %vm163, %v157, -inf
        %v172 = vrot.slane %v171, 4
        %v173 = vmax.f32 %v171, %v172
        %v174 = vrot.slane %v173, 2
        %v175 = vmax.f32 %v173, %v174
        %v176 = vrot.slane %v175, 1
        %v177 = vmax.f32 %v175, %v176
        %v178 = vsel %vm163, %v159, -inf
        %v179 = vrot.slane %v178, 4
        %v180 = vmax.f32 %v178, %v179
        %v181 = vrot.slane %v180, 2
        %v182 = vmax.f32 %v180, %v181
        %v183 = vrot.slane %v182, 1
        %v184 = vmax.f32 %v182, %v183
        %v185 = vsel %vm163, %v161, -inf
        %v186 = vrot.slane %v185, 4
        %v187 = vmax.f32 %v185, %v186
        %v188 = vrot.slane %v187, 2
        %v189 = vmax.f32 %v187, %v188
        %v190 = vrot.slane %v189, 1
        %v191 = vmax.f32 %v189, %v190
        %vm196 = vcmask 1041409
        %v197 = vsel %vm196, %v177, %v170
        %vm198 = vcmask 1042434
        %v199 = vsel %vm198, %v184, %v197
        %vm200 = vcmask 1043459
        %v201 = vsel %vm200, %v191, %v199
        %vm203 = vcmask 27648
        %v204 = vsel %vm203, %v201, -inf
        %205 = vmax.xlane.f32.xlu0 %v204
        %v206 = vpop.xlane.xlu0 %205
        %vm207 = vcmask 60448
        %v208 = vsel %vm207, %v201, -inf
        %209 = vmax.xlane.f32.xlu0 %v208
        %v210 = vpop.xlane.xlu0 %209
        %vm211 = vcmask 93248
        %v212 = vsel %vm211, %v201, -inf
        %213 = vmax.xlane.f32.xlu0 %v212
        %v214 = vpop.xlane.xlu0 %213
        %vm215 = vcmask 126048
        %v216 = vsel %vm215, %v201, -inf
        %217 = vmax.xlane.f32.xlu0 %v216
        %v218 = vpop.xlane.xlu0 %217
        %vm219 = vcmask 130052
        %v220 = vsel %vm219, %v155, -inf
        %v221 = vrot.slane %v220, 4
        %v222 = vmax.f32 %v220, %v221
        %v223 = vrot.slane %v222, 2
        %v224 = vmax.f32 %v222, %v223
        %v225 = vrot.slane %v224, 1
        %v226 = vmax.f32 %v224, %v225
        %v227 = vsel %vm219, %v157, -inf
        %v228 = vrot.slane %v227, 4
        %v229 = vmax.f32 %v227, %v228
        %v230 = vrot.slane %v229, 2
        %v231 = vmax.f32 %v229, %v230
        %v232 = vrot.slane %v231, 1
        %v233 = vmax.f32 %v231, %v232
        %v234 = vsel %vm219, %v159, -inf
        %v235 = vrot.slane %v234, 4
        %v236 = vmax.f32 %v234, %v235
        %v237 = vrot.slane %v236, 2
        %v238 = vmax.f32 %v236, %v237
        %v239 = vrot.slane %v238, 1
        %v240 = vmax.f32 %v238, %v239
        %v241 = vsel %vm219, %v161, -inf
        %v242 = vrot.slane %v241, 4
        %v243 = vmax.f32 %v241, %v242
        %v244 = vrot.slane %v243, 2
        %v245 = vmax.f32 %v243, %v244
        %v246 = vrot.slane %v245, 1
        %v247 = vmax.f32 %v245, %v246
        %v252 = vsel %vm196, %v233, %v226
        %v253 = vsel %vm198, %v240, %v252
        %v254 = vsel %vm200, %v247, %v253
        %v256 = vsel %vm203, %v254, -inf
        %257 = vmax.xlane.f32.xlu0 %v256
        %v258 = vpop.xlane.xlu0 %257
        %v259 = vsel %vm207, %v254, -inf
        %260 = vmax.xlane.f32.xlu0 %v259
        %v261 = vpop.xlane.xlu0 %260
        %v262 = vsel %vm211, %v254, -inf
        %263 = vmax.xlane.f32.xlu0 %v262
        %v264 = vpop.xlane.xlu0 %263
        %v265 = vsel %vm215, %v254, -inf
        %266 = vmax.xlane.f32.xlu0 %v265
        %v267 = vpop.xlane.xlu0 %266
        %v268 = vsel %vm163, %v156, -inf
        %v269 = vrot.slane %v268, 4
        %v270 = vmax.f32 %v268, %v269
        %v271 = vrot.slane %v270, 2
        %v272 = vmax.f32 %v270, %v271
        %v273 = vrot.slane %v272, 1
        %v274 = vmax.f32 %v272, %v273
        %v275 = vsel %vm163, %v158, -inf
        %v276 = vrot.slane %v275, 4
        %v277 = vmax.f32 %v275, %v276
        %v278 = vrot.slane %v277, 2
        %v279 = vmax.f32 %v277, %v278
        %v280 = vrot.slane %v279, 1
        %v281 = vmax.f32 %v279, %v280
        %v282 = vsel %vm163, %v160, -inf
        %v283 = vrot.slane %v282, 4
        %v284 = vmax.f32 %v282, %v283
        %v285 = vrot.slane %v284, 2
        %v286 = vmax.f32 %v284, %v285
        %v287 = vrot.slane %v286, 1
        %v288 = vmax.f32 %v286, %v287
        %v289 = vsel %vm163, %v162, -inf
        %v290 = vrot.slane %v289, 4
        %v291 = vmax.f32 %v289, %v290
        %v292 = vrot.slane %v291, 2
        %v293 = vmax.f32 %v291, %v292
        %v294 = vrot.slane %v293, 1
        %v295 = vmax.f32 %v293, %v294
        %v300 = vsel %vm196, %v281, %v274
        %v301 = vsel %vm198, %v288, %v300
        %v302 = vsel %vm200, %v295, %v301
        %v304 = vsel %vm203, %v302, -inf
        %305 = vmax.xlane.f32.xlu0 %v304
        %v306 = vpop.xlane.xlu0 %305
        %v307 = vsel %vm207, %v302, -inf
        %308 = vmax.xlane.f32.xlu0 %v307
        %v309 = vpop.xlane.xlu0 %308
        %v310 = vsel %vm211, %v302, -inf
        %311 = vmax.xlane.f32.xlu0 %v310
        %v312 = vpop.xlane.xlu0 %311
        %v313 = vsel %vm215, %v302, -inf
        %314 = vmax.xlane.f32.xlu0 %v313
        %v315 = vpop.xlane.xlu0 %314
        %v316 = vsel %vm219, %v156, -inf
        %v317 = vrot.slane %v316, 4
        %v318 = vmax.f32 %v316, %v317
        %v319 = vrot.slane %v318, 2
        %v320 = vmax.f32 %v318, %v319
        %v321 = vrot.slane %v320, 1
        %v322 = vmax.f32 %v320, %v321
        %v323 = vsel %vm219, %v158, -inf
        %v324 = vrot.slane %v323, 4
        %v325 = vmax.f32 %v323, %v324
        %v326 = vrot.slane %v325, 2
        %v327 = vmax.f32 %v325, %v326
        %v328 = vrot.slane %v327, 1
        %v329 = vmax.f32 %v327, %v328
        %v330 = vsel %vm219, %v160, -inf
        %v331 = vrot.slane %v330, 4
        %v332 = vmax.f32 %v330, %v331
        %v333 = vrot.slane %v332, 2
        %v334 = vmax.f32 %v332, %v333
        %v335 = vrot.slane %v334, 1
        %v336 = vmax.f32 %v334, %v335
        %v337 = vsel %vm219, %v162, -inf
        %v338 = vrot.slane %v337, 4
        %v339 = vmax.f32 %v337, %v338
        %v340 = vrot.slane %v339, 2
        %v341 = vmax.f32 %v339, %v340
        %v342 = vrot.slane %v341, 1
        %v343 = vmax.f32 %v341, %v342
        %v348 = vsel %vm196, %v329, %v322
        %v349 = vsel %vm198, %v336, %v348
        %v350 = vsel %vm200, %v343, %v349
        %v352 = vsel %vm203, %v350, -inf
        %353 = vmax.xlane.f32.xlu0 %v352
        %v354 = vpop.xlane.xlu0 %353
        %v355 = vsel %vm207, %v350, -inf
        %356 = vmax.xlane.f32.xlu0 %v355
        %v357 = vpop.xlane.xlu0 %356
        %v358 = vsel %vm211, %v350, -inf
        %359 = vmax.xlane.f32.xlu0 %v358
        %v360 = vpop.xlane.xlu0 %359
        %v361 = vsel %vm215, %v350, -inf
        %362 = vmax.xlane.f32.xlu0 %v361
        %v363 = vpop.xlane.xlu0 %362
        %vm364 = vcmask 7168
        %v365 = vsel %vm364, %v206, %v210
        %vm366 = vcmask 15360
        %v367 = vsel %vm366, %v365, %v214
        %vm368 = vcmask 23552
        %v369 = vsel %vm368, %v367, %v218
        %vm370 = vcmask 31744
        %v371 = vsel %vm370, %v369, %v258
        %vm372 = vcmask 39936
        %v373 = vsel %vm372, %v371, %v261
        %vm374 = vcmask 48128
        %v375 = vsel %vm374, %v373, %v264
        %vm376 = vcmask 56320
        %v377 = vsel %vm376, %v375, %v267
        %vm378 = vcmask 64512
        %v379 = vsel %vm378, %v377, %v306
        %vm380 = vcmask 72704
        %v381 = vsel %vm380, %v379, %v309
        %vm382 = vcmask 80896
        %v383 = vsel %vm382, %v381, %v312
        %vm384 = vcmask 89088
        %v385 = vsel %vm384, %v383, %v315
        %vm386 = vcmask 97280
        %v387 = vsel %vm386, %v385, %v354
        %vm388 = vcmask 105472
        %v389 = vsel %vm388, %v387, %v357
        %vm390 = vcmask 113664
        %v391 = vsel %vm390, %v389, %v360
        %vm392 = vcmask 121856
        %v393 = vsel %vm392, %v391, %v363
        %394 = vst.msk [vmem:[%s153] sm:$0xf] %vm163, %v393
        %v395 = vmax.f32 %v206, %v210
        %v396 = vmax.f32 %v395, %v258
        %v397 = vmax.f32 %v396, %v261
        %v398 = vmax.f32 %v214, %v218
        %v399 = vmax.f32 %v398, %v264
        %v400 = vmax.f32 %v399, %v267
        %v401 = vmax.f32 %v306, %v309
        %v402 = vmax.f32 %v401, %v354
        %v403 = vmax.f32 %v402, %v357
        %v404 = vmax.f32 %v312, %v315
        %v405 = vmax.f32 %v404, %v360
        %v406 = vmax.f32 %v405, %v363
        %v407 = vsel %vm364, %v397, %v400
        %v408 = vsel %vm366, %v407, %v403
        %v409 = vsel %vm368, %v408, %v406
        %411 = vrot.lane.b32.xlu0 %v409, 16
        %v412 = vpop.permute.xlu0 %411
        %vm414 = vcmask 158848
        %415 = vst.msk [vmem:[%s153] sm:$0xf] %vm414, %v412
        %v416 = vmax.f32 %v395, %v214
        %v417 = vmax.f32 %v416, %v218
        %v418 = vmax.f32 %v417, %v258
        %v419 = vmax.f32 %v418, %v261
        %v420 = vmax.f32 %v419, %v264
        %v421 = vmax.f32 %v420, %v267
        %v422 = vmax.f32 %v421, %v306
        %v423 = vmax.f32 %v422, %v309
        %v424 = vmax.f32 %v423, %v312
        %v425 = vmax.f32 %v424, %v315
        %v426 = vmax.f32 %v425, %v354
        %v427 = vmax.f32 %v426, %v357
        %v428 = vmax.f32 %v427, %v360
        %v429 = vmax.f32 %v428, %v363
        %vm430 = vcmask 167072
        %431 = vst.msk [vmem:[%s153] sm:$0xf] %vm430, %v429
        %s432 = sand.u32 %s68, 1
        %s433 = scalar_lea.sflag [#allocation4], %s432
        %s434 = sand.u32 %s68, 1
        %s435 = smul.addr %s434, 4
        %s436 = scalar_lea.vmem [#allocation5], %s435
        // Predicated region
        $region29: #{tpu_custom_call.1} parent=23 // pred_check
          %p437 = pneg %p78
        $region30: #{tpu_custom_call.1} parent=23 // pred_check_branch
          %439 = sbr.rel (%p437) target = $region32
        $region31: #{tpu_custom_call.1} parent=23 // pred_region
          %s441 = ssub.s32 64, 64
          %442 = vsyncadd %s433, %s441
          %s443 = sadd.s32 %s23, %s22
          %s444 = smul.addr %s443, 64
          %s445 = scalar_lea.hbm %s1, %s444
          %s447 = sshll.u32 %s436, 4
          %s448 = int_to_ptr.vmem [resolvable:$true] %s447
          %450 = dma.vmem_to_hbm [thread:$0]  %s448, 64, %s445, %s433
        $region32: #{tpu_custom_call.1} parent=23 // pred_fallthru
          _
      $region24: #{tpu_custom_call.1} parent=5 // pred_fallthru
        _
      %p451 = scmp.le.s32.totalorder 2, %s13
      // Predicated region
      $region33: #{tpu_custom_call.1} parent=5 // pred_check
        %p452 = pneg %p451
      $region34: #{tpu_custom_call.1} parent=5 // pred_check_branch
        %454 = sbr.rel (%p452) target = $region36
      $region35: #{tpu_custom_call.1} parent=5 // pred_region
        %s455 = ssub.s32 %s13, 2
        // Predicated region
        $region37: #{tpu_custom_call.1} parent=35 // pred_check
          %p456 = pneg %p84
        $region38: #{tpu_custom_call.1} parent=35 // pred_check_branch
          %458 = sbr.rel (%p456) target = $region40
        $region39: #{tpu_custom_call.1} parent=35 // pred_region
          %s459 = sand.u32 %s69, 1
          %s460 = scalar_lea.sflag [#allocation4], %s459
          %s461 = sand.u32 %s69, 1
          %s462 = smul.addr %s461, 4
          %s463 = scalar_lea.vmem [#allocation5], %s462
          %464 = dma.done %s460, 64
        $region40: #{tpu_custom_call.1} parent=35 // pred_fallthru
          _
      $region36: #{tpu_custom_call.1} parent=5 // pred_fallthru
        _
    $region6: #{tpu_custom_call.1} parent=1 // loop_footer
      %s17 = sadd.s32 1, %s13
    $region7: #{tpu_custom_call.1} parent=1 // loop_footer_branch
      %12 = sbr.rel target = $region3
    $region8: #{tpu_custom_call.1} parent=1 // loop_exit
      _
    %465 = vsyncpa [#allocation3], 1
    %s466 = scalar_lea.sflag [#allocation3], 1
    %467 = vsyncpa %s466, 1
    %468 = vsyncpa [#allocation4], 1
    %s469 = scalar_lea.sflag [#allocation4], 1
    %470 = vsyncpa %s469, 1

</llo_original>
